<compile_context>
chip_gen: v5e
topology: v5e:2x2
jax: 0.10.0
libtpu: 0.0.40
codegen_flags: <defaults>
</compile_context>

<pallas_src>
import jax
import jax.numpy as jnp
from jax.experimental import pallas as pl
from jax.experimental.pallas import tpu as pltpu


def _round_up(x, m):
    return ((x + m - 1) // m) * m


def _vmem_capacity_bytes():
    """Physical VMEM per TensorCore; conservative (v7x) fallback."""
    try:
        cap = getattr(pltpu.get_tpu_info(), "vmem_capacity_bytes", None)
        if cap:
            return int(cap)
    except Exception:
        pass
    return 64 * 2**20


def _make_pfn_kernel(n_points, n_chunk, cin, cout):
    starts = list(range(0, n_points, n_chunk))

    def pfn_kernel(x_ref, w_ref, shift_ref, o_ref):
        # x_ref:     (TP, N, Cin)   f32 pillar/point features (cast to bf16 here)
        # w_ref:     (Cin, Cout)    bf16, BN scale folded in
        # shift_ref: (1, Cout)      f32 folded BN shift (beta - mean*scale)
        # o_ref:     (TP, Cout)
        tp = x_ref.shape[0]
        w = w_ref[...]

        def chunk_max(j, nc):
            xc = x_ref[:, j:j + nc, :]                        # (TP, nc, Cin) f32
            if nc % 8 == 0:
                # Sublane-compatible (free) flatten -> single large-M MXU matmul.
                x2 = xc.reshape(tp * nc, cin).astype(jnp.bfloat16)
                y = jax.lax.dot_general(
                    x2, w, (((1,), (0,)), ((), ())),
                    preferred_element_type=jnp.float32,
                ).reshape(tp, nc, cout)
            else:
                # Ragged tail chunk: generic 3-D contraction over Cin.
                y = jax.lax.dot_general(
                    xc.astype(jnp.bfloat16), w, (((2,), (0,)), ((), ())),
                    preferred_element_type=jnp.float32,
                )
            return jnp.max(y, axis=1)                         # (TP, Cout) f32

        m = None
        for j in starts:
            nc = min(n_chunk, n_points - j)
            cm = chunk_max(j, nc)
            m = cm if m is None else jnp.maximum(m, cm)

        # shift + ReLU commute with the per-channel max over points (exact).
        o_ref[...] = jnp.maximum(m + shift_ref[...], 0.0).astype(o_ref.dtype)

    return pfn_kernel


def pfn_layer(x, w, scale, shift, *, tile_p=None):
    """x: (1, P, N, Cin) f32; w: (Cin, Cout); scale/shift: (Cout,) -> (P, Cout)."""
    assert x.shape[0] == 1, "module squeezes batch dim 0, so batch must be 1"
    _, P, N, Cin = x.shape
    Cout = w.shape[1]

    # Points-axis chunk: always bounded (<=16) + ragged tail handled in-kernel.
    n_chunk = min(N, 16)

    # ---- complete per-pillar VMEM footprint (bytes) -------------------------
    LANE, SUB = 128, 8
    cin_lanes = _round_up(Cin, LANE)          # x block lane padding (Cin minor)
    cout_lanes = _round_up(Cout, LANE)        # VMEM lane padding of Cout slabs
    n_sub = _round_up(N, SUB)
    nchunk_sub = _round_up(n_chunk, SUB)
    per_pillar = (2 * n_sub * cin_lanes * 4       # double-buffered f32 x block
                  + 2 * nchunk_sub * cout_lanes * 4   # live f32 chunk intermediate
                  + cout_lanes * 4                    # running-max accumulator
                  + 2 * cout_lanes * 4)               # double-buffered output

    cap = _vmem_capacity_bytes()
    if tile_p is None:
        budget = min(int(cap * 0.6), 96 * 2**20)
        tile_p = max(8, min(1024, (budget // per_pillar) // 8 * 8))
        tile_p = min(tile_p, _round_up(P, 8))
        # v7x megacore guard: >=4 grid steps (>=2 pipelined steps per TC).
        if P >= 32 and pl.cdiv(P, tile_p) < 4:
            tile_p = max(8, _round_up(pl.cdiv(P, 4), 8))
    num_tiles = pl.cdiv(P, tile_p)

    # ---- operand preparation (no extra passes over x) ------------------------
    xs = x[0]                                              # (P, N, Cin) f32
    # Fold the BN scale into the conv weights (exact); keep shift f32.
    w_folded = (w.astype(jnp.float32)
                * scale.astype(jnp.float32)[None, :]).astype(jnp.bfloat16)
    shift_row = shift.astype(jnp.float32).reshape(1, Cout)

    est = tile_p * per_pillar + 2 * (_round_up(Cin, SUB) * cout_lanes * 2
                                     + SUB * cout_lanes * 4)
    vmem_limit = int(min(cap * 0.9, max(32 * 2**20, est * 1.5)))

    # Output kept in x.dtype (f32) for module fidelity; emit bf16 here if the
    # consumer accepts it to halve output HBM writes.
    out = pl.pallas_call(
        _make_pfn_kernel(N, n_chunk, Cin, Cout),
        out_shape=jax.ShapeDtypeStruct((P, Cout), x.dtype),
        grid_spec=pltpu.PrefetchScalarGridSpec(
            num_scalar_prefetch=0,
            grid=(num_tiles,),
            in_specs=[
                pl.BlockSpec((tile_p, N, Cin), lambda i: (i, 0, 0)),
                pl.BlockSpec((Cin, Cout), lambda i: (0, 0)),
                pl.BlockSpec((1, Cout), lambda i: (0, 0)),
            ],
            out_specs=pl.BlockSpec((tile_p, Cout), lambda i: (i, 0)),
        ),
        compiler_params=pltpu.CompilerParams(
            dimension_semantics=("parallel",),
            vmem_limit_bytes=vmem_limit,
        ),
    )(xs, w_folded, shift_row)

    return out


def pfn_reference(x, w, scale, shift):
    """Pure-JAX f32 reference with the original op ordering."""
    xs = x[0].astype(jnp.float32)                          # (P, N, Cin)
    y = jnp.einsum("pnc,cd->pnd", xs, w.astype(jnp.float32))
    y = y * scale[None, None, :] + shift[None, None, :]
    y = jnp.maximum(y, 0.0)
    return jnp.max(y, axis=1)                              # (P, Cout)


if __name__ == "__main__":
    # Small PointPillars-like shapes; P is not a multiple of the tile so the
    # partial (unpadded) last block is exercised.
    P, N, Cin, Cout = 13, 32, 10, 64
    eps = 1e-3

    key = jax.random.PRNGKey(0)
    k_x, k_w, k_g, k_b, k_m, k_v = jax.random.split(key, 6)

    x = jax.random.normal(k_x, (1, P, N, Cin), dtype=jnp.float32)

    # Conv2d(in, out, kernel_size=1, bias=False): weight (Cout, Cin, 1, 1) -> (Cin, Cout)
    conv_w = 0.1 * jax.random.normal(k_w, (Cout, Cin, 1, 1), dtype=jnp.float32)
    w = conv_w[:, :, 0, 0].T                               # (Cin, Cout)

    # BatchNorm2d(Cout, eps=1e-3) affine params / running stats (inference mode).
    gamma = 1.0 + 0.1 * jax.random.normal(k_g, (Cout,), dtype=jnp.float32)
    beta = 0.1 * jax.random.normal(k_b, (Cout,), dtype=jnp.float32)
    running_mean = 0.05 * jax.random.normal(k_m, (Cout,), dtype=jnp.float32)
    running_var = 1.0 + 0.1 * jax.nn.softplus(
        jax.random.normal(k_v, (Cout,), dtype=jnp.float32))

    scale = gamma / jnp.sqrt(running_var + eps)
    shift = beta - running_mean * scale

    out = jax.block_until_ready(pfn_layer(x, w, scale, shift))
    ref = jax.block_until_ready(pfn_reference(x, w, scale, shift))

    assert out.shape == (P, Cout), out.shape
    # bf16 MXU inputs -> small tolerance vs the f32 reference.
    assert jnp.allclose(out, ref, atol=2e-2, rtol=2e-2), \
        f"max abs err = {jnp.max(jnp.abs(out - ref))}"
    print("KERNEL_OK")
</pallas_src>

<mosaic_0001>
module attributes {stable_mosaic.version = 11 : i64} {
  func.func @pfn_kernel(%arg0: i32, %arg1: memref<16x32x10xf32, #tpu.memory_space<vmem>>, %arg2: memref<10x64xbf16, #tpu.memory_space<vmem>>, %arg3: memref<1x64xf32, #tpu.memory_space<vmem>>, %arg4: memref<16x64xf32, #tpu.memory_space<vmem>>) attributes {dimension_semantics = [#tpu.dimension_semantics<parallel>], iteration_bounds = array<i64: 1>, scalar_prefetch = 0 : i64, scratch_operands = 0 : i64, tpu.core_type = #tpu.core_type<tc>, window_params = [{transform_indices = @transform_0, window_bounds = array<i64: 16, 32, 10>}, {pipeline_mode = #tpu.pipeline_mode<synchronous>, transform_indices = @transform_1, window_bounds = array<i64: 10, 64>}, {pipeline_mode = #tpu.pipeline_mode<synchronous>, transform_indices = @transform_2, window_bounds = array<i64: 1, 64>}, {transform_indices = @transform_3, window_bounds = array<i64: 16, 64>}]} {
    %c0 = arith.constant 0 : index
    %c0_0 = arith.constant 0 : index
    %0 = vector.load %arg2[%c0, %c0_0] : memref<10x64xbf16, #tpu.memory_space<vmem>>, vector<10x64xbf16>
    %c0_1 = arith.constant 0 : index
    %c0_2 = arith.constant 0 : index
    %c0_3 = arith.constant 0 : index
    %1 = vector.load %arg1[%c0_1, %c0_2, %c0_3] : memref<16x32x10xf32, #tpu.memory_space<vmem>>, vector<16x16x10xf32>
    %2 = vector.shape_cast %1 : vector<16x16x10xf32> to vector<256x10xf32>
    %3 = arith.truncf %2 : vector<256x10xf32> to vector<256x10xbf16>
    %cst = arith.constant dense<0.000000e+00> : vector<256x64xf32>
    %4 = tpu.matmul %3, %0, %cst {dimension_numbers = #tpu.dot_dimension_numbers<[1], [0], [0], [1], [0, 0, 1, 1], [], []>} : vector<256x10xbf16>, vector<10x64xbf16>, vector<256x64xf32> -> vector<256x64xf32>
    %5 = vector.shape_cast %4 : vector<256x64xf32> to vector<16x16x64xf32>
    %cst_4 = arith.constant dense<0xFF800000> : vector<16x64xf32>
    %6 = vector.multi_reduction <maximumf>, %5, %cst_4 [1] : vector<16x16x64xf32> to vector<16x64xf32>
    %c0_5 = arith.constant 0 : index
    %c16 = arith.constant 16 : index
    %c0_6 = arith.constant 0 : index
    %7 = vector.load %arg1[%c0_5, %c16, %c0_6] : memref<16x32x10xf32, #tpu.memory_space<vmem>>, vector<16x16x10xf32>
    %8 = vector.shape_cast %7 : vector<16x16x10xf32> to vector<256x10xf32>
    %9 = arith.truncf %8 : vector<256x10xf32> to vector<256x10xbf16>
    %cst_7 = arith.constant dense<0.000000e+00> : vector<256x64xf32>
    %10 = tpu.matmul %9, %0, %cst_7 {dimension_numbers = #tpu.dot_dimension_numbers<[1], [0], [0], [1], [0, 0, 1, 1], [], []>} : vector<256x10xbf16>, vector<10x64xbf16>, vector<256x64xf32> -> vector<256x64xf32>
    %11 = vector.shape_cast %10 : vector<256x64xf32> to vector<16x16x64xf32>
    %cst_8 = arith.constant dense<0xFF800000> : vector<16x64xf32>
    %12 = vector.multi_reduction <maximumf>, %11, %cst_8 [1] : vector<16x16x64xf32> to vector<16x64xf32>
    %13 = arith.maximumf %6, %12 : vector<16x64xf32>
    %c0_9 = arith.constant 0 : index
    %c0_10 = arith.constant 0 : index
    %14 = vector.load %arg3[%c0_9, %c0_10] : memref<1x64xf32, #tpu.memory_space<vmem>>, vector<1x64xf32>
    %15 = vector.broadcast %14 : vector<1x64xf32> to vector<16x64xf32>
    %16 = arith.addf %13, %15 : vector<16x64xf32>
    %cst_11 = arith.constant 0.000000e+00 : f32
    %17 = vector.broadcast %cst_11 : f32 to vector<16x64xf32>
    %18 = arith.maximumf %16, %17 : vector<16x64xf32>
    %c0_12 = arith.constant 0 : index
    %c0_13 = arith.constant 0 : index
    %19 = vector.load %arg4[%c0_12, %c0_13] : memref<16x64xf32, #tpu.memory_space<vmem>>, vector<16x64xf32>
    tpu.vector_store %arg4[%c0_12, %c0_13], %18 {strides = array<i32>} : memref<16x64xf32, #tpu.memory_space<vmem>>, vector<16x64xf32>,
    return
  }
  func.func @transform_0(%arg0: i32) -> (i32, i32, i32) {
    %c0_i32 = arith.constant 0 : i32
    %c0_i32_0 = arith.constant 0 : i32
    %c0_i32_1 = arith.constant 0 : i32
    return %arg0, %c0_i32, %c0_i32_0 : i32, i32, i32
  }
  func.func @transform_1(%arg0: i32) -> (i32, i32) {
    %c0_i32 = arith.constant 0 : i32
    %c0_i32_0 = arith.constant 0 : i32
    %c0_i32_1 = arith.constant 0 : i32
    return %c0_i32, %c0_i32_0 : i32, i32
  }
  func.func @transform_2(%arg0: i32) -> (i32, i32) {
    %c0_i32 = arith.constant 0 : i32
    %c0_i32_0 = arith.constant 0 : i32
    %c0_i32_1 = arith.constant 0 : i32
    return %c0_i32, %c0_i32_0 : i32, i32
  }
  func.func @transform_3(%arg0: i32) -> (i32, i32) {
    %c0_i32 = arith.constant 0 : i32
    %c0_i32_0 = arith.constant 0 : i32
    return %arg0, %c0_i32 : i32, i32
  }
}

</mosaic_0001>

<llo_original>
// kernel: tpu_custom_call.1
$region0: #{tpu_custom_call.1}
  #allocation0 [shape = 'u32[]', space=smem, size = 0x4, offset = 0x4, fixed_abs, tag = 'smem constant byte address 0x4 - core index']
  #allocation1 [shape = 'u32[72,128]{1,0:T(1,128)}', space=vmem, size = 0x9000, scoped, tag = 'internal scratch']
  %s0 = inlined_call_operand.vmem [shape: f32[13,32,10], index: 0, kind: input, shape index: {}]
  %s1 = inlined_call_operand.vmem [shape: bf16[10,64], index: 1, kind: input, shape index: {}]
  %s2 = inlined_call_operand.vmem [shape: f32[1,64], index: 2, kind: input, shape index: {}]
  %s3 = inlined_call_operand.hbm [shape: f32[13,64], index: 3, kind: output, shape index: {}]
  %s4 = sld [smem:[#allocation0]]
  $region22: #{tpu_custom_call.1} parent=0
    _
  %s6 = ssub.s32 1, %s4
  %s7 = scalar_select 0, %s6, %s4
  $region1: #{tpu_custom_call.1} parent=0
    #allocation2 [shape = 'u8[8192]{0}', space=vmem, size = 0x2000, scoped, tag = 'output window, operand 0, single buffered']
    #allocation3 [shape = 's32[1]{0}', space=sflag, size = 0x4, scoped, tag = 'scoped memory for tpu_custom_call.1']
    %8 = vsyncpa [#allocation3], 0
    // Predicated region
    $region2: #{tpu_custom_call.1} parent=1 // pred_check
      _
    $region3: #{tpu_custom_call.1} parent=1 // pred_check_branch
      %10 = sbr.rel (0) target = $region5
    $region4: #{tpu_custom_call.1} parent=1 // pred_region
      _
    $region5: #{tpu_custom_call.1} parent=1 // pred_fallthru
      _
    // Predicated region
    $region6: #{tpu_custom_call.1} parent=1 // pred_check
      _
    $region7: #{tpu_custom_call.1} parent=1 // pred_check_branch
      %12 = sbr.rel (0) target = $region9
    $region8: #{tpu_custom_call.1} parent=1 // pred_region
      _
    $region9: #{tpu_custom_call.1} parent=1 // pred_fallthru
      _
    // Predicated region
    $region10: #{tpu_custom_call.1} parent=1 // pred_check
      _
    $region11: #{tpu_custom_call.1} parent=1 // pred_check_branch
      %14 = sbr.rel (0) target = $region13
    $region12: #{tpu_custom_call.1} parent=1 // pred_region
      _
    $region13: #{tpu_custom_call.1} parent=1 // pred_fallthru
      _
    %v16 = vld [vmem:[%s1] sm:$0xf]
    %v17 = vld [vmem:[%s1 + $0x4] sm:$0x1]
    %v18 = vld [vmem:[%s0] sm:$0xff]
    %v19 = vld [vmem:[%s0 + $0x8] sm:$0xff]
    %v20 = vld [vmem:[%s0 + $0x20] sm:$0xff]
    %v21 = vld [vmem:[%s0 + $0x28] sm:$0xff]
    %v22 = vld [vmem:[%s0 + $0x40] sm:$0xff]
    %v23 = vld [vmem:[%s0 + $0x48] sm:$0xff]
    %v24 = vld [vmem:[%s0 + $0x60] sm:$0xff]
    %v25 = vld [vmem:[%s0 + $0x68] sm:$0xff]
    %v26 = vld [vmem:[%s0 + $0x80] sm:$0xff]
    %v27 = vld [vmem:[%s0 + $0x88] sm:$0xff]
    %v28 = vld [vmem:[%s0 + $0xa0] sm:$0xff]
    %v29 = vld [vmem:[%s0 + $0xa8] sm:$0xff]
    %v30 = vld [vmem:[%s0 + $0xc0] sm:$0xff]
    %v31 = vld [vmem:[%s0 + $0xc8] sm:$0xff]
    %v32 = vld [vmem:[%s0 + $0xe0] sm:$0xff]
    %v33 = vld [vmem:[%s0 + $0xe8] sm:$0xff]
    %v34 = vld [vmem:[%s0 + $0x100] sm:$0xff]
    %v35 = vld [vmem:[%s0 + $0x108] sm:$0xff]
    %v36 = vld [vmem:[%s0 + $0x120] sm:$0xff]
    %v37 = vld [vmem:[%s0 + $0x128] sm:$0xff]
    %v38 = vld [vmem:[%s0 + $0x140] sm:$0xff]
    %v39 = vld [vmem:[%s0 + $0x148] sm:$0xff]
    %v40 = vld [vmem:[%s0 + $0x160] sm:$0xff]
    %v41 = vld [vmem:[%s0 + $0x168] sm:$0xff]
    %v42 = vld [vmem:[%s0 + $0x180] sm:$0xff]
    %v43 = vld [vmem:[%s0 + $0x188] sm:$0xff]
    %v44 = vld [vmem:[%s0 + $0x1a0] sm:$0xff]
    %v45 = vld [vmem:[%s0 + $0x1a8] sm:$0xff]
    %v46 = vld [vmem:[%s0 + $0x1c0] sm:$0xff]
    %v47 = vld [vmem:[%s0 + $0x1c8] sm:$0xff]
    %v48 = vld [vmem:[%s0 + $0x1e0] sm:$0xff]
    %v49 = vld [vmem:[%s0 + $0x1e8] sm:$0xff]
    %v50 = vpack.c.bf16 %v19, %v18
    %v51 = vpack.c.bf16 %v21, %v20
    %v52 = vpack.c.bf16 %v23, %v22
    %v53 = vpack.c.bf16 %v25, %v24
    %v54 = vpack.c.bf16 %v27, %v26
    %v55 = vpack.c.bf16 %v29, %v28
    %v56 = vpack.c.bf16 %v31, %v30
    %v57 = vpack.c.bf16 %v33, %v32
    %v58 = vpack.c.bf16 %v35, %v34
    %v59 = vpack.c.bf16 %v37, %v36
    %v60 = vpack.c.bf16 %v39, %v38
    %v61 = vpack.c.bf16 %v41, %v40
    %v62 = vpack.c.bf16 %v43, %v42
    %v63 = vpack.c.bf16 %v45, %v44
    %v64 = vpack.c.bf16 %v47, %v46
    %v65 = vpack.c.bf16 %v49, %v48
    %v68 = vunpack.c.l.b16 %v16
    %v69 = vunpack.c.l.b16 %v17
    %v70 = vpack.c.b16 %v69, %v68
    %vm71 = vcmask 80896
    %v73 = vsel %vm71, %v50, 0
    %v76 = vsel %vm71, %v51, 0
    %v79 = vsel %vm71, %v52, 0
    %v82 = vsel %vm71, %v53, 0
    %v85 = vsel %vm71, %v54, 0
    %v88 = vsel %vm71, %v55, 0
    %v91 = vsel %vm71, %v56, 0
    %v94 = vsel %vm71, %v57, 0
    %v97 = vsel %vm71, %v58, 0
    %v100 = vsel %vm71, %v59, 0
    %v103 = vsel %vm71, %v60, 0
    %v106 = vsel %vm71, %v61, 0
    %v109 = vsel %vm71, %v62, 0
    %v112 = vsel %vm71, %v63, 0
    %v115 = vsel %vm71, %v64, 0
    %v118 = vsel %vm71, %v65, 0
    %vm120 = vcmask 1044480
    %v122 = vsel %vm120, %v70, 0
    %124 = vmatpush.bf16.msra.mxu0 0
    %125 = vmatpush.bf16.msra.mxu0 0
    %126 = vmatpush.bf16.msra.mxu0 0
    %127 = vmatpush.bf16.msra.mxu0 0
    %128 = vmatpush.bf16.msra.mxu0 0
    %129 = vmatpush.bf16.msra.mxu0 0
    %130 = vmatpush.bf16.msra.mxu0 0
    %131 = vmatpush.bf16.msra.mxu0 %v122
    %132 = vmatmul.bf16.gmra.mxu0 %v73
    %v133 = vpop.f32.mrf.mxu0
    %v134 = vadd.f32 0.0, %v133
    %v135 = vpop.f32.mrf.mxu0
    %v136 = vadd.f32 0.0, %v135
    %137 = vmatmul.bf16.gmra.mxu0 %v76
    %v138 = vpop.f32.mrf.mxu0
    %v139 = vadd.f32 0.0, %v138
    %v140 = vpop.f32.mrf.mxu0
    %v141 = vadd.f32 0.0, %v140
    %142 = vmatmul.bf16.gmra.mxu0 %v79
    %v143 = vpop.f32.mrf.mxu0
    %v144 = vadd.f32 0.0, %v143
    %v145 = vpop.f32.mrf.mxu0
    %v146 = vadd.f32 0.0, %v145
    %147 = vmatmul.bf16.gmra.mxu0 %v82
    %v148 = vpop.f32.mrf.mxu0
    %v149 = vadd.f32 0.0, %v148
    %v150 = vpop.f32.mrf.mxu0
    %v151 = vadd.f32 0.0, %v150
    %152 = vmatmul.bf16.gmra.mxu0 %v85
    %v153 = vpop.f32.mrf.mxu0
    %v154 = vadd.f32 0.0, %v153
    %v155 = vpop.f32.mrf.mxu0
    %v156 = vadd.f32 0.0, %v155
    %157 = vmatmul.bf16.gmra.mxu0 %v88
    %v158 = vpop.f32.mrf.mxu0
    %v159 = vadd.f32 0.0, %v158
    %v160 = vpop.f32.mrf.mxu0
    %v161 = vadd.f32 0.0, %v160
    %162 = vmatmul.bf16.gmra.mxu0 %v91
    %v163 = vpop.f32.mrf.mxu0
    %v164 = vadd.f32 0.0, %v163
    %v165 = vpop.f32.mrf.mxu0
    %v166 = vadd.f32 0.0, %v165
    %167 = vmatmul.bf16.gmra.mxu0 %v94
    %v168 = vpop.f32.mrf.mxu0
    %v169 = vadd.f32 0.0, %v168
    %v170 = vpop.f32.mrf.mxu0
    %v171 = vadd.f32 0.0, %v170
    %172 = vmatmul.bf16.gmra.mxu0 %v97
    %v173 = vpop.f32.mrf.mxu0
    %v174 = vadd.f32 0.0, %v173
    %v175 = vpop.f32.mrf.mxu0
    %v176 = vadd.f32 0.0, %v175
    %177 = vmatmul.bf16.gmra.mxu0 %v100
    %v178 = vpop.f32.mrf.mxu0
    %v179 = vadd.f32 0.0, %v178
    %v180 = vpop.f32.mrf.mxu0
    %v181 = vadd.f32 0.0, %v180
    %182 = vmatmul.bf16.gmra.mxu0 %v103
    %v183 = vpop.f32.mrf.mxu0
    %v184 = vadd.f32 0.0, %v183
    %v185 = vpop.f32.mrf.mxu0
    %v186 = vadd.f32 0.0, %v185
    %187 = vmatmul.bf16.gmra.mxu0 %v106
    %v188 = vpop.f32.mrf.mxu0
    %v189 = vadd.f32 0.0, %v188
    %v190 = vpop.f32.mrf.mxu0
    %v191 = vadd.f32 0.0, %v190
    %192 = vmatmul.bf16.gmra.mxu0 %v109
    %v193 = vpop.f32.mrf.mxu0
    %v194 = vadd.f32 0.0, %v193
    %v195 = vpop.f32.mrf.mxu0
    %v196 = vadd.f32 0.0, %v195
    %197 = vmatmul.bf16.gmra.mxu0 %v112
    %v198 = vpop.f32.mrf.mxu0
    %v199 = vadd.f32 0.0, %v198
    %v200 = vpop.f32.mrf.mxu0
    %v201 = vadd.f32 0.0, %v200
    %202 = vmatmul.bf16.gmra.mxu0 %v115
    %v203 = vpop.f32.mrf.mxu0
    %v204 = vadd.f32 0.0, %v203
    %v205 = vpop.f32.mrf.mxu0
    %v206 = vadd.f32 0.0, %v205
    %207 = vmatmul.bf16.gmra.mxu0 %v118
    %v208 = vpop.f32.mrf.mxu0
    %v209 = vadd.f32 0.0, %v208
    %v210 = vpop.f32.mrf.mxu0
    %v211 = vadd.f32 0.0, %v210
    %212 = vdwg.mxu0
    %vm213 = vcmask 523264
    %v214 = vsel %vm213, %v134, -inf
    %v215 = vsel %vm213, %v136, -inf
    %v216 = vmax.f32 %v214, %v215
    %v217 = vrot.slane %v216, 4
    %v218 = vmax.f32 %v216, %v217
    %v219 = vrot.slane %v218, 2
    %v220 = vmax.f32 %v218, %v219
    %v221 = vrot.slane %v220, 1
    %v222 = vmax.f32 %v220, %v221
    %v223 = vsel %vm213, %v139, -inf
    %v224 = vsel %vm213, %v141, -inf
    %v225 = vmax.f32 %v223, %v224
    %v226 = vrot.slane %v225, 4
    %v227 = vmax.f32 %v225, %v226
    %v228 = vrot.slane %v227, 2
    %v229 = vmax.f32 %v227, %v228
    %v230 = vrot.slane %v229, 1
    %v231 = vmax.f32 %v229, %v230
    %v232 = vsel %vm213, %v144, -inf
    %v233 = vsel %vm213, %v146, -inf
    %v234 = vmax.f32 %v232, %v233
    %v235 = vrot.slane %v234, 4
    %v236 = vmax.f32 %v234, %v235
    %v237 = vrot.slane %v236, 2
    %v238 = vmax.f32 %v236, %v237
    %v239 = vrot.slane %v238, 1
    %v240 = vmax.f32 %v238, %v239
    %v241 = vsel %vm213, %v149, -inf
    %v242 = vsel %vm213, %v151, -inf
    %v243 = vmax.f32 %v241, %v242
    %v244 = vrot.slane %v243, 4
    %v245 = vmax.f32 %v243, %v244
    %v246 = vrot.slane %v245, 2
    %v247 = vmax.f32 %v245, %v246
    %v248 = vrot.slane %v247, 1
    %v249 = vmax.f32 %v247, %v248
    %v250 = vsel %vm213, %v154, -inf
    %v251 = vsel %vm213, %v156, -inf
    %v252 = vmax.f32 %v250, %v251
    %v253 = vrot.slane %v252, 4
    %v254 = vmax.f32 %v252, %v253
    %v255 = vrot.slane %v254, 2
    %v256 = vmax.f32 %v254, %v255
    %v257 = vrot.slane %v256, 1
    %v258 = vmax.f32 %v256, %v257
    %v259 = vsel %vm213, %v159, -inf
    %v260 = vsel %vm213, %v161, -inf
    %v261 = vmax.f32 %v259, %v260
    %v262 = vrot.slane %v261, 4
    %v263 = vmax.f32 %v261, %v262
    %v264 = vrot.slane %v263, 2
    %v265 = vmax.f32 %v263, %v264
    %v266 = vrot.slane %v265, 1
    %v267 = vmax.f32 %v265, %v266
    %v268 = vsel %vm213, %v164, -inf
    %v269 = vsel %vm213, %v166, -inf
    %v270 = vmax.f32 %v268, %v269
    %v271 = vrot.slane %v270, 4
    %v272 = vmax.f32 %v270, %v271
    %v273 = vrot.slane %v272, 2
    %v274 = vmax.f32 %v272, %v273
    %v275 = vrot.slane %v274, 1
    %v276 = vmax.f32 %v274, %v275
    %v277 = vsel %vm213, %v169, -inf
    %v278 = vsel %vm213, %v171, -inf
    %v279 = vmax.f32 %v277, %v278
    %v280 = vrot.slane %v279, 4
    %v281 = vmax.f32 %v279, %v280
    %v282 = vrot.slane %v281, 2
    %v283 = vmax.f32 %v281, %v282
    %v284 = vrot.slane %v283, 1
    %v285 = vmax.f32 %v283, %v284
    %v286 = vsel %vm213, %v174, -inf
    %v287 = vsel %vm213, %v176, -inf
    %v288 = vmax.f32 %v286, %v287
    %v289 = vrot.slane %v288, 4
    %v290 = vmax.f32 %v288, %v289
    %v291 = vrot.slane %v290, 2
    %v292 = vmax.f32 %v290, %v291
    %v293 = vrot.slane %v292, 1
    %v294 = vmax.f32 %v292, %v293
    %v295 = vsel %vm213, %v179, -inf
    %v296 = vsel %vm213, %v181, -inf
    %v297 = vmax.f32 %v295, %v296
    %v298 = vrot.slane %v297, 4
    %v299 = vmax.f32 %v297, %v298
    %v300 = vrot.slane %v299, 2
    %v301 = vmax.f32 %v299, %v300
    %v302 = vrot.slane %v301, 1
    %v303 = vmax.f32 %v301, %v302
    %v304 = vsel %vm213, %v184, -inf
    %v305 = vsel %vm213, %v186, -inf
    %v306 = vmax.f32 %v304, %v305
    %v307 = vrot.slane %v306, 4
    %v308 = vmax.f32 %v306, %v307
    %v309 = vrot.slane %v308, 2
    %v310 = vmax.f32 %v308, %v309
    %v311 = vrot.slane %v310, 1
    %v312 = vmax.f32 %v310, %v311
    %v313 = vsel %vm213, %v189, -inf
    %v314 = vsel %vm213, %v191, -inf
    %v315 = vmax.f32 %v313, %v314
    %v316 = vrot.slane %v315, 4
    %v317 = vmax.f32 %v315, %v316
    %v318 = vrot.slane %v317, 2
    %v319 = vmax.f32 %v317, %v318
    %v320 = vrot.slane %v319, 1
    %v321 = vmax.f32 %v319, %v320
    %v322 = vsel %vm213, %v194, -inf
    %v323 = vsel %vm213, %v196, -inf
    %v324 = vmax.f32 %v322, %v323
    %v325 = vrot.slane %v324, 4
    %v326 = vmax.f32 %v324, %v325
    %v327 = vrot.slane %v326, 2
    %v328 = vmax.f32 %v326, %v327
    %v329 = vrot.slane %v328, 1
    %v330 = vmax.f32 %v328, %v329
    %v331 = vsel %vm213, %v199, -inf
    %v332 = vsel %vm213, %v201, -inf
    %v333 = vmax.f32 %v331, %v332
    %v334 = vrot.slane %v333, 4
    %v335 = vmax.f32 %v333, %v334
    %v336 = vrot.slane %v335, 2
    %v337 = vmax.f32 %v335, %v336
    %v338 = vrot.slane %v337, 1
    %v339 = vmax.f32 %v337, %v338
    %v340 = vsel %vm213, %v204, -inf
    %v341 = vsel %vm213, %v206, -inf
    %v342 = vmax.f32 %v340, %v341
    %v343 = vrot.slane %v342, 4
    %v344 = vmax.f32 %v342, %v343
    %v345 = vrot.slane %v344, 2
    %v346 = vmax.f32 %v344, %v345
    %v347 = vrot.slane %v346, 1
    %v348 = vmax.f32 %v346, %v347
    %v349 = vsel %vm213, %v209, -inf
    %v350 = vsel %vm213, %v211, -inf
    %v351 = vmax.f32 %v349, %v350
    %v352 = vrot.slane %v351, 4
    %v353 = vmax.f32 %v351, %v352
    %v354 = vrot.slane %v353, 2
    %v355 = vmax.f32 %v353, %v354
    %v356 = vrot.slane %v355, 1
    %v357 = vmax.f32 %v355, %v356
    %v358 = vld [vmem:[%s0 + $0x10] sm:$0xff]
    %v359 = vld [vmem:[%s0 + $0x18] sm:$0xff]
    %v360 = vld [vmem:[%s0 + $0x30] sm:$0xff]
    %v361 = vld [vmem:[%s0 + $0x38] sm:$0xff]
    %v362 = vld [vmem:[%s0 + $0x50] sm:$0xff]
    %v363 = vld [vmem:[%s0 + $0x58] sm:$0xff]
    %v364 = vld [vmem:[%s0 + $0x70] sm:$0xff]
    %v365 = vld [vmem:[%s0 + $0x78] sm:$0xff]
    %v366 = vld [vmem:[%s0 + $0x90] sm:$0xff]
    %v367 = vld [vmem:[%s0 + $0x98] sm:$0xff]
    %v368 = vld [vmem:[%s0 + $0xb0] sm:$0xff]
    %v369 = vld [vmem:[%s0 + $0xb8] sm:$0xff]
    %v370 = vld [vmem:[%s0 + $0xd0] sm:$0xff]
    %v371 = vld [vmem:[%s0 + $0xd8] sm:$0xff]
    %v372 = vld [vmem:[%s0 + $0xf0] sm:$0xff]
    %v373 = vld [vmem:[%s0 + $0xf8] sm:$0xff]
    %v374 = vld [vmem:[%s0 + $0x110] sm:$0xff]
    %v375 = vld [vmem:[%s0 + $0x118] sm:$0xff]
    %v376 = vld [vmem:[%s0 + $0x130] sm:$0xff]
    %v377 = vld [vmem:[%s0 + $0x138] sm:$0xff]
    %v378 = vld [vmem:[%s0 + $0x150] sm:$0xff]
    %v379 = vld [vmem:[%s0 + $0x158] sm:$0xff]
    %v380 = vld [vmem:[%s0 + $0x170] sm:$0xff]
    %v381 = vld [vmem:[%s0 + $0x178] sm:$0xff]
    %v382 = vld [vmem:[%s0 + $0x190] sm:$0xff]
    %v383 = vld [vmem:[%s0 + $0x198] sm:$0xff]
    %v384 = vld [vmem:[%s0 + $0x1b0] sm:$0xff]
    %v385 = vld [vmem:[%s0 + $0x1b8] sm:$0xff]
    %v386 = vld [vmem:[%s0 + $0x1d0] sm:$0xff]
    %v387 = vld [vmem:[%s0 + $0x1d8] sm:$0xff]
    %v388 = vld [vmem:[%s0 + $0x1f0] sm:$0xff]
    %v389 = vld [vmem:[%s0 + $0x1f8] sm:$0xff]
    %v390 = vpack.c.bf16 %v359, %v358
    %v391 = vpack.c.bf16 %v361, %v360
    %v392 = vpack.c.bf16 %v363, %v362
    %v393 = vpack.c.bf16 %v365, %v364
    %v394 = vpack.c.bf16 %v367, %v366
    %v395 = vpack.c.bf16 %v369, %v368
    %v396 = vpack.c.bf16 %v371, %v370
    %v397 = vpack.c.bf16 %v373, %v372
    %v398 = vpack.c.bf16 %v375, %v374
    %v399 = vpack.c.bf16 %v377, %v376
    %v400 = vpack.c.bf16 %v379, %v378
    %v401 = vpack.c.bf16 %v381, %v380
    %v402 = vpack.c.bf16 %v383, %v382
    %v403 = vpack.c.bf16 %v385, %v384
    %v404 = vpack.c.bf16 %v387, %v386
    %v405 = vpack.c.bf16 %v389, %v388
    %v407 = vsel %vm71, %v390, 0
    %v410 = vsel %vm71, %v391, 0
    %v413 = vsel %vm71, %v392, 0
    %v416 = vsel %vm71, %v393, 0
    %v419 = vsel %vm71, %v394, 0
    %v422 = vsel %vm71, %v395, 0
    %v425 = vsel %vm71, %v396, 0
    %v428 = vsel %vm71, %v397, 0
    %v431 = vsel %vm71, %v398, 0
    %v434 = vsel %vm71, %v399, 0
    %v437 = vsel %vm71, %v400, 0
    %v440 = vsel %vm71, %v401, 0
    %v443 = vsel %vm71, %v402, 0
    %v446 = vsel %vm71, %v403, 0
    %v449 = vsel %vm71, %v404, 0
    %v452 = vsel %vm71, %v405, 0
    %454 = vmatpush.bf16.msra.mxu0 0
    %455 = vmatpush.bf16.msra.mxu0 0
    %456 = vmatpush.bf16.msra.mxu0 0
    %457 = vmatpush.bf16.msra.mxu0 0
    %458 = vmatpush.bf16.msra.mxu0 0
    %459 = vmatpush.bf16.msra.mxu0 0
    %460 = vmatpush.bf16.msra.mxu0 0
    %461 = vmatpush.bf16.msra.mxu0 %v122
    %462 = vmatmul.bf16.gmra.mxu0 %v407
    %v463 = vpop.f32.mrf.mxu0
    %v464 = vadd.f32 0.0, %v463
    %v465 = vpop.f32.mrf.mxu0
    %v466 = vadd.f32 0.0, %v465
    %467 = vmatmul.bf16.gmra.mxu0 %v410
    %v468 = vpop.f32.mrf.mxu0
    %v469 = vadd.f32 0.0, %v468
    %v470 = vpop.f32.mrf.mxu0
    %v471 = vadd.f32 0.0, %v470
    %472 = vmatmul.bf16.gmra.mxu0 %v413
    %v473 = vpop.f32.mrf.mxu0
    %v474 = vadd.f32 0.0, %v473
    %v475 = vpop.f32.mrf.mxu0
    %v476 = vadd.f32 0.0, %v475
    %477 = vmatmul.bf16.gmra.mxu0 %v416
    %v478 = vpop.f32.mrf.mxu0
    %v479 = vadd.f32 0.0, %v478
    %v480 = vpop.f32.mrf.mxu0
    %v481 = vadd.f32 0.0, %v480
    %482 = vmatmul.bf16.gmra.mxu0 %v419
    %v483 = vpop.f32.mrf.mxu0
    %v484 = vadd.f32 0.0, %v483
    %v485 = vpop.f32.mrf.mxu0
    %v486 = vadd.f32 0.0, %v485
    %487 = vmatmul.bf16.gmra.mxu0 %v422
    %v488 = vpop.f32.mrf.mxu0
    %v489 = vadd.f32 0.0, %v488
    %v490 = vpop.f32.mrf.mxu0
    %v491 = vadd.f32 0.0, %v490
    %492 = vmatmul.bf16.gmra.mxu0 %v425
    %v493 = vpop.f32.mrf.mxu0
    %v494 = vadd.f32 0.0, %v493
    %v495 = vpop.f32.mrf.mxu0
    %v496 = vadd.f32 0.0, %v495
    %497 = vmatmul.bf16.gmra.mxu0 %v428
    %v498 = vpop.f32.mrf.mxu0
    %v499 = vadd.f32 0.0, %v498
    %v500 = vpop.f32.mrf.mxu0
    %v501 = vadd.f32 0.0, %v500
    %502 = vmatmul.bf16.gmra.mxu0 %v431
    %v503 = vpop.f32.mrf.mxu0
    %v504 = vadd.f32 0.0, %v503
    %v505 = vpop.f32.mrf.mxu0
    %v506 = vadd.f32 0.0, %v505
    %507 = vmatmul.bf16.gmra.mxu0 %v434
    %v508 = vpop.f32.mrf.mxu0
    %v509 = vadd.f32 0.0, %v508
    %v510 = vpop.f32.mrf.mxu0
    %v511 = vadd.f32 0.0, %v510
    %512 = vmatmul.bf16.gmra.mxu0 %v437
    %v513 = vpop.f32.mrf.mxu0
    %v514 = vadd.f32 0.0, %v513
    %v515 = vpop.f32.mrf.mxu0
    %v516 = vadd.f32 0.0, %v515
    %517 = vmatmul.bf16.gmra.mxu0 %v440
    %v518 = vpop.f32.mrf.mxu0
    %v519 = vadd.f32 0.0, %v518
    %v520 = vpop.f32.mrf.mxu0
    %v521 = vadd.f32 0.0, %v520
    %522 = vmatmul.bf16.gmra.mxu0 %v443
    %v523 = vpop.f32.mrf.mxu0
    %v524 = vadd.f32 0.0, %v523
    %v525 = vpop.f32.mrf.mxu0
    %v526 = vadd.f32 0.0, %v525
    %527 = vmatmul.bf16.gmra.mxu0 %v446
    %v528 = vpop.f32.mrf.mxu0
    %v529 = vadd.f32 0.0, %v528
    %v530 = vpop.f32.mrf.mxu0
    %v531 = vadd.f32 0.0, %v530
    %532 = vmatmul.bf16.gmra.mxu0 %v449
    %v533 = vpop.f32.mrf.mxu0
    %v534 = vadd.f32 0.0, %v533
    %v535 = vpop.f32.mrf.mxu0
    %v536 = vadd.f32 0.0, %v535
    %537 = vmatmul.bf16.gmra.mxu0 %v452
    %v538 = vpop.f32.mrf.mxu0
    %v539 = vadd.f32 0.0, %v538
    %v540 = vpop.f32.mrf.mxu0
    %v541 = vadd.f32 0.0, %v540
    %542 = vdwg.mxu0
    %v543 = vsel %vm213, %v464, -inf
    %v544 = vsel %vm213, %v466, -inf
    %v545 = vmax.f32 %v543, %v544
    %v546 = vrot.slane %v545, 4
    %v547 = vmax.f32 %v545, %v546
    %v548 = vrot.slane %v547, 2
    %v549 = vmax.f32 %v547, %v548
    %v550 = vrot.slane %v549, 1
    %v551 = vmax.f32 %v549, %v550
    %v552 = vsel %vm213, %v469, -inf
    %v553 = vsel %vm213, %v471, -inf
    %v554 = vmax.f32 %v552, %v553
    %v555 = vrot.slane %v554, 4
    %v556 = vmax.f32 %v554, %v555
    %v557 = vrot.slane %v556, 2
    %v558 = vmax.f32 %v556, %v557
    %v559 = vrot.slane %v558, 1
    %v560 = vmax.f32 %v558, %v559
    %v561 = vsel %vm213, %v474, -inf
    %v562 = vsel %vm213, %v476, -inf
    %v563 = vmax.f32 %v561, %v562
    %v564 = vrot.slane %v563, 4
    %v565 = vmax.f32 %v563, %v564
    %v566 = vrot.slane %v565, 2
    %v567 = vmax.f32 %v565, %v566
    %v568 = vrot.slane %v567, 1
    %v569 = vmax.f32 %v567, %v568
    %v570 = vsel %vm213, %v479, -inf
    %v571 = vsel %vm213, %v481, -inf
    %v572 = vmax.f32 %v570, %v571
    %v573 = vrot.slane %v572, 4
    %v574 = vmax.f32 %v572, %v573
    %v575 = vrot.slane %v574, 2
    %v576 = vmax.f32 %v574, %v575
    %v577 = vrot.slane %v576, 1
    %v578 = vmax.f32 %v576, %v577
    %v579 = vsel %vm213, %v484, -inf
    %v580 = vsel %vm213, %v486, -inf
    %v581 = vmax.f32 %v579, %v580
    %v582 = vrot.slane %v581, 4
    %v583 = vmax.f32 %v581, %v582
    %v584 = vrot.slane %v583, 2
    %v585 = vmax.f32 %v583, %v584
    %v586 = vrot.slane %v585, 1
    %v587 = vmax.f32 %v585, %v586
    %v588 = vsel %vm213, %v489, -inf
    %v589 = vsel %vm213, %v491, -inf
    %v590 = vmax.f32 %v588, %v589
    %v591 = vrot.slane %v590, 4
    %v592 = vmax.f32 %v590, %v591
    %v593 = vrot.slane %v592, 2
    %v594 = vmax.f32 %v592, %v593
    %v595 = vrot.slane %v594, 1
    %v596 = vmax.f32 %v594, %v595
    %v597 = vsel %vm213, %v494, -inf
    %v598 = vsel %vm213, %v496, -inf
    %v599 = vmax.f32 %v597, %v598
    %v600 = vrot.slane %v599, 4
    %v601 = vmax.f32 %v599, %v600
    %v602 = vrot.slane %v601, 2
    %v603 = vmax.f32 %v601, %v602
    %v604 = vrot.slane %v603, 1
    %v605 = vmax.f32 %v603, %v604
    %v606 = vsel %vm213, %v499, -inf
    %v607 = vsel %vm213, %v501, -inf
    %v608 = vmax.f32 %v606, %v607
    %v609 = vrot.slane %v608, 4
    %v610 = vmax.f32 %v608, %v609
    %v611 = vrot.slane %v610, 2
    %v612 = vmax.f32 %v610, %v611
    %v613 = vrot.slane %v612, 1
    %v614 = vmax.f32 %v612, %v613
    %v615 = vsel %vm213, %v504, -inf
    %v616 = vsel %vm213, %v506, -inf
    %v617 = vmax.f32 %v615, %v616
    %v618 = vrot.slane %v617, 4
    %v619 = vmax.f32 %v617, %v618
    %v620 = vrot.slane %v619, 2
    %v621 = vmax.f32 %v619, %v620
    %v622 = vrot.slane %v621, 1
    %v623 = vmax.f32 %v621, %v622
    %v624 = vsel %vm213, %v509, -inf
    %v625 = vsel %vm213, %v511, -inf
    %v626 = vmax.f32 %v624, %v625
    %v627 = vrot.slane %v626, 4
    %v628 = vmax.f32 %v626, %v627
    %v629 = vrot.slane %v628, 2
    %v630 = vmax.f32 %v628, %v629
    %v631 = vrot.slane %v630, 1
    %v632 = vmax.f32 %v630, %v631
    %v633 = vsel %vm213, %v514, -inf
    %v634 = vsel %vm213, %v516, -inf
    %v635 = vmax.f32 %v633, %v634
    %v636 = vrot.slane %v635, 4
    %v637 = vmax.f32 %v635, %v636
    %v638 = vrot.slane %v637, 2
    %v639 = vmax.f32 %v637, %v638
    %v640 = vrot.slane %v639, 1
    %v641 = vmax.f32 %v639, %v640
    %v642 = vsel %vm213, %v519, -inf
    %v643 = vsel %vm213, %v521, -inf
    %v644 = vmax.f32 %v642, %v643
    %v645 = vrot.slane %v644, 4
    %v646 = vmax.f32 %v644, %v645
    %v647 = vrot.slane %v646, 2
    %v648 = vmax.f32 %v646, %v647
    %v649 = vrot.slane %v648, 1
    %v650 = vmax.f32 %v648, %v649
    %v651 = vsel %vm213, %v524, -inf
    %v652 = vsel %vm213, %v526, -inf
    %v653 = vmax.f32 %v651, %v652
    %v654 = vrot.slane %v653, 4
    %v655 = vmax.f32 %v653, %v654
    %v656 = vrot.slane %v655, 2
    %v657 = vmax.f32 %v655, %v656
    %v658 = vrot.slane %v657, 1
    %v659 = vmax.f32 %v657, %v658
    %v660 = vsel %vm213, %v529, -inf
    %v661 = vsel %vm213, %v531, -inf
    %v662 = vmax.f32 %v660, %v661
    %v663 = vrot.slane %v662, 4
    %v664 = vmax.f32 %v662, %v663
    %v665 = vrot.slane %v664, 2
    %v666 = vmax.f32 %v664, %v665
    %v667 = vrot.slane %v666, 1
    %v668 = vmax.f32 %v666, %v667
    %v669 = vsel %vm213, %v534, -inf
    %v670 = vsel %vm213, %v536, -inf
    %v671 = vmax.f32 %v669, %v670
    %v672 = vrot.slane %v671, 4
    %v673 = vmax.f32 %v671, %v672
    %v674 = vrot.slane %v673, 2
    %v675 = vmax.f32 %v673, %v674
    %v676 = vrot.slane %v675, 1
    %v677 = vmax.f32 %v675, %v676
    %v678 = vsel %vm213, %v539, -inf
    %v679 = vsel %vm213, %v541, -inf
    %v680 = vmax.f32 %v678, %v679
    %v681 = vrot.slane %v680, 4
    %v682 = vmax.f32 %v680, %v681
    %v683 = vrot.slane %v682, 2
    %v684 = vmax.f32 %v682, %v683
    %v685 = vrot.slane %v684, 1
    %v686 = vmax.f32 %v684, %v685
    %v687 = vmax.f32 %v222, %v551
    %v688 = vmax.f32 %v231, %v560
    %v689 = vmax.f32 %v240, %v569
    %v690 = vmax.f32 %v249, %v578
    %v691 = vmax.f32 %v258, %v587
    %v692 = vmax.f32 %v267, %v596
    %v693 = vmax.f32 %v276, %v605
    %v694 = vmax.f32 %v285, %v614
    %v695 = vmax.f32 %v294, %v623
    %v696 = vmax.f32 %v303, %v632
    %v697 = vmax.f32 %v312, %v641
    %v698 = vmax.f32 %v321, %v650
    %v699 = vmax.f32 %v330, %v659
    %v700 = vmax.f32 %v339, %v668
    %v701 = vmax.f32 %v348, %v677
    %v702 = vmax.f32 %v357, %v686
    %v703 = vld [vmem:[%s2] sm:$0x1]
    %v705 = vperm.slane %v703, 0
    %v707 = vadd.f32 %v687, %v705
    %v708 = vadd.f32 %v688, %v705
    %v709 = vadd.f32 %v689, %v705
    %v710 = vadd.f32 %v690, %v705
    %v711 = vadd.f32 %v691, %v705
    %v712 = vadd.f32 %v692, %v705
    %v713 = vadd.f32 %v693, %v705
    %v714 = vadd.f32 %v694, %v705
    %v715 = vadd.f32 %v695, %v705
    %v716 = vadd.f32 %v696, %v705
    %v717 = vadd.f32 %v697, %v705
    %v718 = vadd.f32 %v698, %v705
    %v719 = vadd.f32 %v699, %v705
    %v720 = vadd.f32 %v700, %v705
    %v721 = vadd.f32 %v701, %v705
    %v722 = vadd.f32 %v702, %v705
    %v723 = vmax.f32 %v707, 0.0
    %v724 = vmax.f32 %v708, 0.0
    %v725 = vmax.f32 %v709, 0.0
    %v726 = vmax.f32 %v710, 0.0
    %v727 = vmax.f32 %v711, 0.0
    %v728 = vmax.f32 %v712, 0.0
    %v729 = vmax.f32 %v713, 0.0
    %v730 = vmax.f32 %v714, 0.0
    %v731 = vmax.f32 %v715, 0.0
    %v732 = vmax.f32 %v716, 0.0
    %v733 = vmax.f32 %v717, 0.0
    %v734 = vmax.f32 %v718, 0.0
    %v735 = vmax.f32 %v719, 0.0
    %v736 = vmax.f32 %v720, 0.0
    %v737 = vmax.f32 %v721, 0.0
    %v738 = vmax.f32 %v722, 0.0
    %v755 = vrot.slane %v724, 7
    %vm756 = vcmask 1041409
    %v757 = vsel %vm756, %v755, %v723
    %v758 = vrot.slane %v725, 6
    %vm759 = vcmask 1042434
    %v760 = vsel %vm759, %v758, %v757
    %v761 = vrot.slane %v726, 5
    %vm762 = vcmask 1043459
    %v763 = vsel %vm762, %v761, %v760
    %v764 = vrot.slane %v727, 4
    %vm765 = vcmask 1044484
    %v766 = vsel %vm765, %v764, %v763
    %v767 = vrot.slane %v728, 3
    %vm768 = vcmask 1045509
    %v769 = vsel %vm768, %v767, %v766
    %v770 = vrot.slane %v729, 2
    %vm771 = vcmask 1046534
    %v772 = vsel %vm771, %v770, %v769
    %v773 = vrot.slane %v730, 1
    %vm774 = vcmask 1047559
    %v775 = vsel %vm774, %v773, %v772
    %v776 = vrot.slane %v732, 7
    %v777 = vsel %vm756, %v776, %v731
    %v778 = vrot.slane %v733, 6
    %v779 = vsel %vm759, %v778, %v777
    %v780 = vrot.slane %v734, 5
    %v781 = vsel %vm762, %v780, %v779
    %v782 = vrot.slane %v735, 4
    %v783 = vsel %vm765, %v782, %v781
    %v784 = vrot.slane %v736, 3
    %v785 = vsel %vm768, %v784, %v783
    %v786 = vrot.slane %v737, 2
    %v787 = vsel %vm771, %v786, %v785
    %v788 = vrot.slane %v738, 1
    %v789 = vsel %vm774, %v788, %v787
    %792 = vst.msk [vmem:[#allocation2] sm:$0xff] %vm213, %v775
    %793 = vst.msk [vmem:[#allocation2 + $0x8] sm:$0xff] %vm213, %v789
    // Predicated region
    $region14: #{tpu_custom_call.1} parent=1 // pred_check
      _
    $region15: #{tpu_custom_call.1} parent=1 // pred_check_branch
      %795 = sbr.rel (0) target = $region17
    $region16: #{tpu_custom_call.1} parent=1 // pred_region
      %797 = vsyncadd [#allocation3], 0
      %s798 = sshll.u32 [#allocation2], 4
      %s799 = int_to_ptr.vmem [resolvable:$true] %s798
      %s800 = sshll.u32 %s3, 4
      %s801 = int_to_ptr.hbm [resolvable:$true] %s800
      %806 = dma.vmem_to_hbm [thread:$0]  %s799, 256, %s801, [#allocation3], 128, 128, 8
    $region17: #{tpu_custom_call.1} parent=1 // pred_fallthru
      _
    // Predicated region
    $region18: #{tpu_custom_call.1} parent=1 // pred_check
      _
    $region19: #{tpu_custom_call.1} parent=1 // pred_check_branch
      %808 = sbr.rel (0) target = $region21
    $region20: #{tpu_custom_call.1} parent=1 // pred_region
      %810 = dma.done [#allocation3], 256
    $region21: #{tpu_custom_call.1} parent=1 // pred_fallthru
      _
    %811 = vsyncpa [#allocation3], 1

</llo_original>
